<compile_context>
chip_gen: v6e
topology: v6e:2x2x1
jax: 0.10.0
libtpu: 0.0.40
codegen_flags: <defaults>
</compile_context>

<pallas_src>
import functools

import jax
import jax.numpy as jnp
from jax.experimental import pallas as pl
from jax.experimental.pallas import tpu as pltpu


def _round_up(n, m):
    return -(-n // m) * m


def _pad_axis(a, axis, multiple):
    """Zero-pad `a` along `axis` up to the next multiple of `multiple`."""
    pad = (-a.shape[axis]) % multiple
    if pad == 0:
        return a
    widths = [(0, 0)] * a.ndim
    widths[axis] = (0, pad)
    return jnp.pad(a, widths)


def _pick_hidden_chunk(h_p, target=512):
    """Largest multiple of 128 <= target that divides h_p (h_p is 128-aligned)."""
    if h_p <= target:
        return h_p
    for c in range(target, 127, -128):
        if h_p % c == 0:
            return c
    return 128


_HAS_BUFFERED = hasattr(pl, "Buffered")


def _resident_spec(shape):
    """BlockSpec for an operand that stays VMEM-resident across all grid steps.

    Single-buffered (fetched once) when the installed Pallas supports
    pipeline_mode=pl.Buffered(1); falls back to the default otherwise.
    """
    index_map = lambda i: (0,) * len(shape)
    if _HAS_BUFFERED:
        try:
            return pl.BlockSpec(shape, index_map, pipeline_mode=pl.Buffered(1))
        except TypeError:
            pass
    return pl.BlockSpec(shape, index_map)


def _mlp_forward_kernel(x_ref, w1_ref, b1_ref, w2_ref, b2_ref, o_ref, *,
                        hidden_chunk):
    """Fused MLP forward on one batch tile: out = relu(x @ w1 + b1) @ w2 + b2.

    x/w1/w2 are bf16, biases f32.  The hidden dim is walked in static
    `hidden_chunk`-wide column blocks so the f32 hidden intermediate stays
    bounded at (tm, hidden_chunk).  Both matmuls accumulate in f32 on the MXU;
    bias-add + ReLU run on the VPU in f32; single downcast at the output store.
    """
    x = x_ref[...]                                        # (tm, Din_p) bf16
    h_total = w1_ref.shape[1]
    n_chunks = h_total // hidden_chunk
    acc = jnp.zeros((x.shape[0], o_ref.shape[1]), jnp.float32)
    for c in range(n_chunks):                             # static unroll
        sl = pl.ds(c * hidden_chunk, hidden_chunk)
        h = jnp.dot(x, w1_ref[:, sl], preferred_element_type=jnp.float32)
        h = jnp.maximum(h + b1_ref[:, sl], 0.0)           # b1 chunk is (1, hc)
        acc = acc + jnp.dot(h.astype(w2_ref.dtype), w2_ref[sl, :],
                            preferred_element_type=jnp.float32)
    o_ref[...] = (acc + b2_ref[...]).astype(o_ref.dtype)


def prepare_params(w1, b1, w2, b2):
    """One-time parameter prep: lane-dense (128) zero-padding + bf16/f32 casts.

    Parameters are static across forward calls, so the HBM pass for padding
    and casting is paid once here instead of on every module_forward call.
    Zero padding is exact: padded contraction rows/cols contribute nothing.
    """
    return dict(
        w1=_pad_axis(_pad_axis(w1, 0, 128), 1, 128).astype(jnp.bfloat16),
        b1=_pad_axis(b1, 1, 128).astype(jnp.float32),
        w2=_pad_axis(_pad_axis(w2, 0, 128), 1, 128).astype(jnp.bfloat16),
        b2=_pad_axis(b2, 1, 128).astype(jnp.float32),
    )


def module_forward(x, params, dout, *, batch_tile=512, out_dtype=None):
    """Pallas-backed equivalent of Module.forward(X) -> self.net(X).

    x: [B, Din]; params: output of prepare_params; dout: true output width.
    Returns [B, dout] in out_dtype (defaults to x.dtype).
    """
    B, Din = x.shape
    w1p, b1p, w2p, b2p = params["w1"], params["b1"], params["w2"], params["b2"]
    Din_p, H_p = w1p.shape
    Dout_p = w2p.shape[1]
    out_dtype = x.dtype if out_dtype is None else out_dtype
    out_itemsize = jnp.dtype(out_dtype).itemsize

    # --- Activation prep: Din -> 128 multiple (zero-pad, exact for the
    # contraction), batch -> 16 multiple (bf16 packs 2 rows per sublane).
    # Single fused pad, and a no-op when already aligned.
    pad_b = (-B) % 16
    pad_d = Din_p - Din
    if pad_b or pad_d:
        x = jnp.pad(x, ((0, pad_b), (0, pad_d)))
    xp = x.astype(jnp.bfloat16)
    B_p = xp.shape[0]

    # --- Hidden chunking bounds the (tm, hc) f32 intermediate. --------------
    hc = _pick_hidden_chunk(H_p)

    # --- Batch tile: multiple of 16; >= 2 grid steps when B allows so the
    # "parallel" batch axis can feed both v7x TensorCores; shrink until the
    # VMEM budget fits ~48 MiB (v7x's 64 MiB physical, with headroom).
    tm = max(16, min(_round_up(batch_tile, 16),
                     _round_up(-(-B_p // 2), 16),
                     B_p))

    def vmem_bytes(tm_):
        weights = (w1p.size + w2p.size) * 2 + (b1p.size + b2p.size) * 4
        x_tiles = 2 * tm_ * Din_p * 2                 # double-buffered bf16 in
        o_tiles = 2 * tm_ * Dout_p * out_itemsize     # double-buffered out
        hidden = tm_ * hc * 4 + tm_ * hc * 2          # f32 chunk + bf16 cast
        acc = tm_ * Dout_p * 4                        # f32 accumulator
        return weights + x_tiles + o_tiles + hidden + acc

    while vmem_bytes(tm) > (48 << 20) and tm > 16:
        tm = max(16, _round_up(tm // 2, 16))

    grid = (pl.cdiv(B_p, tm),)                        # ragged last block OK:
    #                                                   extra rows are garbage
    #                                                   and never stored/used.
    vmem_limit = int(min(max(2 * vmem_bytes(tm), 8 << 20), 64 << 20))

    kernel = functools.partial(_mlp_forward_kernel, hidden_chunk=hc)

    out_p = pl.pallas_call(
        kernel,
        out_shape=jax.ShapeDtypeStruct((B_p, Dout_p), out_dtype),
        grid=grid,
        in_specs=[
            pl.BlockSpec((tm, Din_p), lambda i: (i, 0)),   # streamed x tile
            _resident_spec((Din_p, H_p)),                  # w1 (single-buffered)
            _resident_spec((1, H_p)),                      # b1
            _resident_spec((H_p, Dout_p)),                 # w2
            _resident_spec((1, Dout_p)),                   # b2
        ],
        out_specs=pl.BlockSpec((tm, Dout_p), lambda i: (i, 0)),
        compiler_params=pltpu.CompilerParams(
            dimension_semantics=("parallel",),
            vmem_limit_bytes=vmem_limit,
        ),
    )(xp, w1p, b1p, w2p, b2p)

    # Strip batch / output-lane padding.
    return out_p[:B, :dout]


def _reference_forward(x, w1, b1, w2, b2):
    """Pure-JAX reference with the same bf16 operand quantization as the kernel."""
    xb = x.astype(jnp.bfloat16)
    w1b = w1.astype(jnp.bfloat16)
    w2b = w2.astype(jnp.bfloat16)
    h = jnp.dot(xb, w1b, preferred_element_type=jnp.float32) + b1
    h = jnp.maximum(h, 0.0)
    y = jnp.dot(h.astype(jnp.bfloat16), w2b,
                preferred_element_type=jnp.float32) + b2
    return y.astype(x.dtype)


if __name__ == "__main__":
    # Small shapes consistent with a d2l-style MLP net.
    B, Din, H, Dout = 8, 32, 64, 16

    key = jax.random.PRNGKey(0)
    k_x, k_w1, k_b1, k_w2, k_b2 = jax.random.split(key, 5)

    x = jax.random.normal(k_x, (B, Din), dtype=jnp.float32)
    # Deterministic parameter init (scaled normal, Kaiming-like).
    w1 = jax.random.normal(k_w1, (Din, H), dtype=jnp.float32) * (2.0 / Din) ** 0.5
    b1 = jax.random.normal(k_b1, (1, H), dtype=jnp.float32) * 0.01
    w2 = jax.random.normal(k_w2, (H, Dout), dtype=jnp.float32) * (2.0 / H) ** 0.5
    b2 = jax.random.normal(k_b2, (1, Dout), dtype=jnp.float32) * 0.01

    params = prepare_params(w1, b1, w2, b2)           # one-time pad + bf16 cast
    fwd = jax.jit(lambda xx, pp: module_forward(xx, pp, Dout))  # fuses x pad/cast
    out = jax.block_until_ready(fwd(x, params))

    ref = _reference_forward(x, w1, b1, w2, b2)
    assert out.shape == (B, Dout)
    assert jnp.allclose(out, ref, atol=1e-2, rtol=1e-2), "mismatch vs reference"

    print("KERNEL_OK")
</pallas_src>

<mosaic_0001>
module attributes {stable_mosaic.version = 11 : i64} {
  func.func @_mlp_forward_kernel(%arg0: i32, %arg1: memref<16x128xbf16, #tpu.memory_space<vmem>>, %arg2: memref<128x128xbf16, #tpu.memory_space<vmem>>, %arg3: memref<1x128xf32, #tpu.memory_space<vmem>>, %arg4: memref<128x128xbf16, #tpu.memory_space<vmem>>, %arg5: memref<1x128xf32, #tpu.memory_space<vmem>>, %arg6: memref<16x128xf32, #tpu.memory_space<vmem>>) attributes {dimension_semantics = [#tpu.dimension_semantics<parallel>], iteration_bounds = array<i64: 1>, scalar_prefetch = 0 : i64, scratch_operands = 0 : i64, tpu.core_type = #tpu.core_type<tc>, window_params = [{transform_indices = @transform_0, window_bounds = array<i64: 16, 128>}, {pipeline_mode = #tpu.pipeline_mode<synchronous>, transform_indices = @transform_1, window_bounds = array<i64: 128, 128>}, {pipeline_mode = #tpu.pipeline_mode<synchronous>, transform_indices = @transform_2, window_bounds = array<i64: 1, 128>}, {pipeline_mode = #tpu.pipeline_mode<synchronous>, transform_indices = @transform_3, window_bounds = array<i64: 128, 128>}, {pipeline_mode = #tpu.pipeline_mode<synchronous>, transform_indices = @transform_4, window_bounds = array<i64: 1, 128>}, {transform_indices = @transform_5, window_bounds = array<i64: 16, 128>}]} {
    %c0 = arith.constant 0 : index
    %c0_0 = arith.constant 0 : index
    %0 = vector.load %arg1[%c0, %c0_0] : memref<16x128xbf16, #tpu.memory_space<vmem>>, vector<16x128xbf16>
    %cst = arith.constant 0.000000e+00 : f32
    %1 = vector.broadcast %cst : f32 to vector<16x128xf32>
    %c0_1 = arith.constant 0 : index
    %c0_2 = arith.constant 0 : index
    %2 = vector.load %arg2[%c0_1, %c0_2] : memref<128x128xbf16, #tpu.memory_space<vmem>>, vector<128x128xbf16>
    %cst_3 = arith.constant dense<0.000000e+00> : vector<16x128xf32>
    %3 = tpu.matmul %0, %2, %cst_3 {dimension_numbers = #tpu.dot_dimension_numbers<[1], [0], [0], [1], [0, 0, 1, 1], [], []>} : vector<16x128xbf16>, vector<128x128xbf16>, vector<16x128xf32> -> vector<16x128xf32>
    %c0_4 = arith.constant 0 : index
    %c0_5 = arith.constant 0 : index
    %4 = vector.load %arg3[%c0_4, %c0_5] : memref<1x128xf32, #tpu.memory_space<vmem>>, vector<1x128xf32>
    %5 = vector.broadcast %4 : vector<1x128xf32> to vector<16x128xf32>
    %6 = arith.addf %3, %5 : vector<16x128xf32>
    %cst_6 = arith.constant 0.000000e+00 : f32
    %7 = vector.broadcast %cst_6 : f32 to vector<16x128xf32>
    %8 = arith.maximumf %6, %7 : vector<16x128xf32>
    %9 = arith.truncf %8 : vector<16x128xf32> to vector<16x128xbf16>
    %c0_7 = arith.constant 0 : index
    %c0_8 = arith.constant 0 : index
    %10 = vector.load %arg4[%c0_7, %c0_8] : memref<128x128xbf16, #tpu.memory_space<vmem>>, vector<128x128xbf16>
    %cst_9 = arith.constant dense<0.000000e+00> : vector<16x128xf32>
    %11 = tpu.matmul %9, %10, %cst_9 {dimension_numbers = #tpu.dot_dimension_numbers<[1], [0], [0], [1], [0, 0, 1, 1], [], []>} : vector<16x128xbf16>, vector<128x128xbf16>, vector<16x128xf32> -> vector<16x128xf32>
    %12 = arith.addf %1, %11 : vector<16x128xf32>
    %c0_10 = arith.constant 0 : index
    %c0_11 = arith.constant 0 : index
    %13 = vector.load %arg5[%c0_10, %c0_11] : memref<1x128xf32, #tpu.memory_space<vmem>>, vector<1x128xf32>
    %14 = vector.broadcast %13 : vector<1x128xf32> to vector<16x128xf32>
    %15 = arith.addf %12, %14 : vector<16x128xf32>
    %c0_12 = arith.constant 0 : index
    %c0_13 = arith.constant 0 : index
    %16 = vector.load %arg6[%c0_12, %c0_13] : memref<16x128xf32, #tpu.memory_space<vmem>>, vector<16x128xf32>
    tpu.vector_store %arg6[%c0_12, %c0_13], %15 {strides = array<i32>} : memref<16x128xf32, #tpu.memory_space<vmem>>, vector<16x128xf32>,
    return
  }
  func.func @transform_0(%arg0: i32) -> (i32, i32) {
    %c0_i32 = arith.constant 0 : i32
    %c0_i32_0 = arith.constant 0 : i32
    return %arg0, %c0_i32 : i32, i32
  }
  func.func @transform_1(%arg0: i32) -> (i32, i32) {
    %c0_i32 = arith.constant 0 : i32
    %c0_i32_0 = arith.constant 0 : i32
    %c0_i32_1 = arith.constant 0 : i32
    return %c0_i32, %c0_i32_0 : i32, i32
  }
  func.func @transform_2(%arg0: i32) -> (i32, i32) {
    %c0_i32 = arith.constant 0 : i32
    %c0_i32_0 = arith.constant 0 : i32
    %c0_i32_1 = arith.constant 0 : i32
    return %c0_i32, %c0_i32_0 : i32, i32
  }
  func.func @transform_3(%arg0: i32) -> (i32, i32) {
    %c0_i32 = arith.constant 0 : i32
    %c0_i32_0 = arith.constant 0 : i32
    %c0_i32_1 = arith.constant 0 : i32
    return %c0_i32, %c0_i32_0 : i32, i32
  }
  func.func @transform_4(%arg0: i32) -> (i32, i32) {
    %c0_i32 = arith.constant 0 : i32
    %c0_i32_0 = arith.constant 0 : i32
    %c0_i32_1 = arith.constant 0 : i32
    return %c0_i32, %c0_i32_0 : i32, i32
  }
  func.func @transform_5(%arg0: i32) -> (i32, i32) {
    %c0_i32 = arith.constant 0 : i32
    %c0_i32_0 = arith.constant 0 : i32
    return %arg0, %c0_i32 : i32, i32
  }
}

</mosaic_0001>

<llo_original>
// kernel: _lambda_.1
$region0: #{_lambda_.1}
  #allocation0 [shape = 'u32[]', space=smem, size = 0x4, offset = 0x4, fixed_abs, tag = 'smem constant byte address 0x4 - core index']
  #allocation1 [shape = 'u32[144,128]{1,0:T(1,128)}', space=vmem, size = 0x12000, scoped, tag = 'internal scratch']
  %s0 = inlined_call_operand.vmem [shape: bf16[16,128], index: 0, kind: input, shape index: {}]
  %s1 = inlined_call_operand.hbm [shape: bf16[128,128], index: 1, kind: input, shape index: {}]
  %s2 = inlined_call_operand.vmem [shape: f32[1,128], index: 2, kind: input, shape index: {}]
  %s3 = inlined_call_operand.hbm [shape: bf16[128,128], index: 3, kind: input, shape index: {}]
  %s4 = inlined_call_operand.vmem [shape: f32[1,128], index: 4, kind: input, shape index: {}]
  %s5 = inlined_call_operand.vmem [shape: f32[16,128], index: 5, kind: output, shape index: {}]
  %s6 = sld [smem:[#allocation0]]
  $region38: #{_lambda_.1} parent=0
    _
  %s8 = ssub.s32 1, %s6
  %s9 = scalar_select 0, %s8, %s6
  $region1: #{_lambda_.1} parent=0
    #allocation2 [shape = 'u8[32768]{0}', space=vmem, size = 0x8000, scoped, tag = 'input window, operand 1, single buffered']
    #allocation3 [shape = 's32[1]{0}', space=sflag, size = 0x4, scoped, tag = 'scoped memory for _lambda_.1']
    #allocation4 [shape = 'u8[32768]{0}', space=vmem, size = 0x8000, scoped, tag = 'input window, operand 3, single buffered']
    #allocation5 [shape = 's32[1]{0}', space=sflag, size = 0x4, scoped, tag = 'scoped memory for _lambda_.1']
    %10 = vsyncpa [#allocation3], 0
    %11 = vsyncpa [#allocation5], 0
    // Predicated region
    $region2: #{_lambda_.1} parent=1 // pred_check
      _
    $region3: #{_lambda_.1} parent=1 // pred_check_branch
      %13 = sbr.rel (0) target = $region5
    $region4: #{_lambda_.1} parent=1 // pred_region
      _
    $region5: #{_lambda_.1} parent=1 // pred_fallthru
      _
    // Predicated region
    $region6: #{_lambda_.1} parent=1 // pred_check
      _
    $region7: #{_lambda_.1} parent=1 // pred_check_branch
      %15 = sbr.rel (0) target = $region9
    $region8: #{_lambda_.1} parent=1 // pred_region
      %s17 = ssub.s32 1024, 1024
      %18 = vsyncadd [#allocation3], %s17
      %s19 = sshll.u32 [#allocation2], 4
      %s20 = int_to_ptr.vmem [resolvable:$true] %s19
      %25 = dma.hbm_to_vmem [thread:$0]  %s1, 1024, %s20, [#allocation3], 64, 64, 4
    $region9: #{_lambda_.1} parent=1 // pred_fallthru
      _
    // Predicated region
    $region10: #{_lambda_.1} parent=1 // pred_check
      _
    $region11: #{_lambda_.1} parent=1 // pred_check_branch
      %27 = sbr.rel (0) target = $region13
    $region12: #{_lambda_.1} parent=1 // pred_region
      _
    $region13: #{_lambda_.1} parent=1 // pred_fallthru
      _
    // Predicated region
    $region14: #{_lambda_.1} parent=1 // pred_check
      _
    $region15: #{_lambda_.1} parent=1 // pred_check_branch
      %29 = sbr.rel (0) target = $region17
    $region16: #{_lambda_.1} parent=1 // pred_region
      %s31 = ssub.s32 1024, 1024
      %32 = vsyncadd [#allocation5], %s31
      %s33 = sshll.u32 [#allocation4], 4
      %s34 = int_to_ptr.vmem [resolvable:$true] %s33
      %39 = dma.hbm_to_vmem [thread:$0]  %s3, 1024, %s34, [#allocation5], 64, 64, 4
    $region17: #{_lambda_.1} parent=1 // pred_fallthru
      _
    // Predicated region
    $region18: #{_lambda_.1} parent=1 // pred_check
      _
    $region19: #{_lambda_.1} parent=1 // pred_check_branch
      %41 = sbr.rel (0) target = $region21
    $region20: #{_lambda_.1} parent=1 // pred_region
      _
    $region21: #{_lambda_.1} parent=1 // pred_fallthru
      _
    // Predicated region
    $region22: #{_lambda_.1} parent=1 // pred_check
      _
    $region23: #{_lambda_.1} parent=1 // pred_check_branch
      %43 = sbr.rel (0) target = $region25
    $region24: #{_lambda_.1} parent=1 // pred_region
      %44 = dma.done [#allocation3], 1024
    $region25: #{_lambda_.1} parent=1 // pred_fallthru
      _
    // Predicated region
    $region26: #{_lambda_.1} parent=1 // pred_check
      _
    $region27: #{_lambda_.1} parent=1 // pred_check_branch
      %46 = sbr.rel (0) target = $region29
    $region28: #{_lambda_.1} parent=1 // pred_region
      %47 = dma.done [#allocation5], 1024
    $region29: #{_lambda_.1} parent=1 // pred_fallthru
      _
    %v49 = vld [vmem:[%s0] sm:$0xf]
    %v50 = vld [vmem:[%s0 + $0x4] sm:$0xf]
    %v51 = vld [vmem:[#allocation2] sm:$0xf]
    %v52 = vld [vmem:[#allocation2 + $0x4] sm:$0xf]
    %v53 = vld [vmem:[#allocation2 + $0x8] sm:$0xf]
    %v54 = vld [vmem:[#allocation2 + $0xc] sm:$0xf]
    %v55 = vld [vmem:[#allocation2 + $0x10] sm:$0xf]
    %v56 = vld [vmem:[#allocation2 + $0x14] sm:$0xf]
    %v57 = vld [vmem:[#allocation2 + $0x18] sm:$0xf]
    %v58 = vld [vmem:[#allocation2 + $0x1c] sm:$0xf]
    %v59 = vld [vmem:[#allocation2 + $0x20] sm:$0xf]
    %v60 = vld [vmem:[#allocation2 + $0x24] sm:$0xf]
    %v61 = vld [vmem:[#allocation2 + $0x28] sm:$0xf]
    %v62 = vld [vmem:[#allocation2 + $0x2c] sm:$0xf]
    %v63 = vld [vmem:[#allocation2 + $0x30] sm:$0xf]
    %v64 = vld [vmem:[#allocation2 + $0x34] sm:$0xf]
    %v65 = vld [vmem:[#allocation2 + $0x38] sm:$0xf]
    %v66 = vld [vmem:[#allocation2 + $0x3c] sm:$0xf]
    %v67 = vld [vmem:[%s2] sm:$0x1]
    %v69 = vlaneseq
    %v70 = vshrl.u32 %v69, 7
    %v71 = vsub.s32 0, %v70
    %v72 = vrot.slane %v67, %v71
    %v76 = vunpack.c.l.b16 %v49
    %v77 = vunpack.c.l.b16 %v50
    %v78 = vpack.c.b16 %v77, %v76
    %v96 = vunpack.c.l.b16 %v51
    %v97 = vunpack.c.l.b16 %v52
    %v98 = vunpack.c.l.b16 %v53
    %v99 = vunpack.c.l.b16 %v54
    %v100 = vunpack.c.l.b16 %v55
    %v101 = vunpack.c.l.b16 %v56
    %v102 = vunpack.c.l.b16 %v57
    %v103 = vunpack.c.l.b16 %v58
    %v104 = vunpack.c.l.b16 %v59
    %v105 = vunpack.c.l.b16 %v60
    %v106 = vunpack.c.l.b16 %v61
    %v107 = vunpack.c.l.b16 %v62
    %v108 = vunpack.c.l.b16 %v63
    %v109 = vunpack.c.l.b16 %v64
    %v110 = vunpack.c.l.b16 %v65
    %v111 = vunpack.c.l.b16 %v66
    %v112 = vpack.c.b16 %v97, %v96
    %v113 = vpack.c.b16 %v99, %v98
    %v114 = vpack.c.b16 %v101, %v100
    %v115 = vpack.c.b16 %v103, %v102
    %v116 = vpack.c.b16 %v105, %v104
    %v117 = vpack.c.b16 %v107, %v106
    %v118 = vpack.c.b16 %v109, %v108
    %v119 = vpack.c.b16 %v111, %v110
    %128 = vmatprep.subr.bf16.mxu0 0
    %129 = vmatpush1.bf16.msra.mxu0 %v119
    %130 = vmatprep.subr.bf16.mxu0 0
    %131 = vmatpush1.bf16.msra.mxu0 %v118
    %132 = vmatprep.subr.bf16.mxu0 0
    %133 = vmatpush1.bf16.msra.mxu0 %v117
    %134 = vmatprep.subr.bf16.mxu0 0
    %135 = vmatpush1.bf16.msra.mxu0 %v116
    %136 = vmatprep.subr.bf16.mxu0 0
    %137 = vmatpush1.bf16.msra.mxu0 %v115
    %138 = vmatprep.subr.bf16.mxu0 0
    %139 = vmatpush1.bf16.msra.mxu0 %v114
    %140 = vmatprep.subr.bf16.mxu0 0
    %141 = vmatpush1.bf16.msra.mxu0 %v113
    %142 = vmatprep.subr.bf16.mxu0 0
    %143 = vmatpush1.bf16.msra.mxu0 %v112
    %144 = vmatprep.subr.bf16.mxu0 0
    %145 = vmatpush2.bf16.msra.mxu0 0
    %146 = vmatprep.subr.bf16.mxu0 0
    %147 = vmatpush2.bf16.msra.mxu0 0
    %148 = vmatprep.subr.bf16.mxu0 0
    %149 = vmatpush2.bf16.msra.mxu0 0
    %150 = vmatprep.subr.bf16.mxu0 0
    %151 = vmatpush2.bf16.msra.mxu0 0
    %152 = vmatprep.subr.bf16.mxu0 0
    %153 = vmatpush2.bf16.msra.mxu0 0
    %154 = vmatprep.subr.bf16.mxu0 0
    %155 = vmatpush2.bf16.msra.mxu0 0
    %156 = vmatprep.subr.bf16.mxu0 0
    %157 = vmatpush2.bf16.msra.mxu0 0
    %158 = vmatprep.subr.bf16.mxu0 0
    %159 = vmatpush2.bf16.msra.mxu0 0
    %160 = vmatprep.mubr.bf16.mxu0 0
    %161 = vmatmul.mubr.bf16.gmra.mxu0 %v78
    %v162 = vpop.f32.mrf.mxu0
    %v163 = vadd.f32 %v72, %v162
    %v164 = vpop.f32.mrf.mxu0
    %v165 = vpop.f32.mrf.mxu0
    %v166 = vadd.f32 %v72, %v165
    %v167 = vpop.f32.mrf.mxu0
    %168 = vdwg.mxu0
    %v169 = vmax.f32 %v163, 0.0
    %v170 = vmax.f32 %v166, 0.0
    %v171 = vpack.c.bf16 %v170, %v169
    %v172 = vld [vmem:[#allocation4] sm:$0xf]
    %v173 = vld [vmem:[#allocation4 + $0x4] sm:$0xf]
    %v174 = vld [vmem:[#allocation4 + $0x8] sm:$0xf]
    %v175 = vld [vmem:[#allocation4 + $0xc] sm:$0xf]
    %v176 = vld [vmem:[#allocation4 + $0x10] sm:$0xf]
    %v177 = vld [vmem:[#allocation4 + $0x14] sm:$0xf]
    %v178 = vld [vmem:[#allocation4 + $0x18] sm:$0xf]
    %v179 = vld [vmem:[#allocation4 + $0x1c] sm:$0xf]
    %v180 = vld [vmem:[#allocation4 + $0x20] sm:$0xf]
    %v181 = vld [vmem:[#allocation4 + $0x24] sm:$0xf]
    %v182 = vld [vmem:[#allocation4 + $0x28] sm:$0xf]
    %v183 = vld [vmem:[#allocation4 + $0x2c] sm:$0xf]
    %v184 = vld [vmem:[#allocation4 + $0x30] sm:$0xf]
    %v185 = vld [vmem:[#allocation4 + $0x34] sm:$0xf]
    %v186 = vld [vmem:[#allocation4 + $0x38] sm:$0xf]
    %v187 = vld [vmem:[#allocation4 + $0x3c] sm:$0xf]
    %v188 = vld [vmem:[%s4] sm:$0x1]
    %v190 = vlaneseq
    %v191 = vshrl.u32 %v190, 7
    %v192 = vsub.s32 0, %v191
    %v193 = vrot.slane %v188, %v192
    %v211 = vunpack.c.l.b16 %v172
    %v212 = vunpack.c.l.b16 %v173
    %v213 = vunpack.c.l.b16 %v174
    %v214 = vunpack.c.l.b16 %v175
    %v215 = vunpack.c.l.b16 %v176
    %v216 = vunpack.c.l.b16 %v177
    %v217 = vunpack.c.l.b16 %v178
    %v218 = vunpack.c.l.b16 %v179
    %v219 = vunpack.c.l.b16 %v180
    %v220 = vunpack.c.l.b16 %v181
    %v221 = vunpack.c.l.b16 %v182
    %v222 = vunpack.c.l.b16 %v183
    %v223 = vunpack.c.l.b16 %v184
    %v224 = vunpack.c.l.b16 %v185
    %v225 = vunpack.c.l.b16 %v186
    %v226 = vunpack.c.l.b16 %v187
    %v227 = vpack.c.b16 %v212, %v211
    %v228 = vpack.c.b16 %v214, %v213
    %v229 = vpack.c.b16 %v216, %v215
    %v230 = vpack.c.b16 %v218, %v217
    %v231 = vpack.c.b16 %v220, %v219
    %v232 = vpack.c.b16 %v222, %v221
    %v233 = vpack.c.b16 %v224, %v223
    %v234 = vpack.c.b16 %v226, %v225
    %243 = vmatprep.subr.bf16.mxu0 0
    %244 = vmatpush1.bf16.msra.mxu0 %v234
    %245 = vmatprep.subr.bf16.mxu0 0
    %246 = vmatpush1.bf16.msra.mxu0 %v233
    %247 = vmatprep.subr.bf16.mxu0 0
    %248 = vmatpush1.bf16.msra.mxu0 %v232
    %249 = vmatprep.subr.bf16.mxu0 0
    %250 = vmatpush1.bf16.msra.mxu0 %v231
    %251 = vmatprep.subr.bf16.mxu0 0
    %252 = vmatpush1.bf16.msra.mxu0 %v230
    %253 = vmatprep.subr.bf16.mxu0 0
    %254 = vmatpush1.bf16.msra.mxu0 %v229
    %255 = vmatprep.subr.bf16.mxu0 0
    %256 = vmatpush1.bf16.msra.mxu0 %v228
    %257 = vmatprep.subr.bf16.mxu0 0
    %258 = vmatpush1.bf16.msra.mxu0 %v227
    %259 = vmatprep.subr.bf16.mxu0 0
    %260 = vmatpush2.bf16.msra.mxu0 0
    %261 = vmatprep.subr.bf16.mxu0 0
    %262 = vmatpush2.bf16.msra.mxu0 0
    %263 = vmatprep.subr.bf16.mxu0 0
    %264 = vmatpush2.bf16.msra.mxu0 0
    %265 = vmatprep.subr.bf16.mxu0 0
    %266 = vmatpush2.bf16.msra.mxu0 0
    %267 = vmatprep.subr.bf16.mxu0 0
    %268 = vmatpush2.bf16.msra.mxu0 0
    %269 = vmatprep.subr.bf16.mxu0 0
    %270 = vmatpush2.bf16.msra.mxu0 0
    %271 = vmatprep.subr.bf16.mxu0 0
    %272 = vmatpush2.bf16.msra.mxu0 0
    %273 = vmatprep.subr.bf16.mxu0 0
    %274 = vmatpush2.bf16.msra.mxu0 0
    %275 = vmatprep.mubr.bf16.mxu0 0
    %276 = vmatmul.mubr.bf16.gmra.mxu0 %v171
    %v277 = vpop.f32.mrf.mxu0
    %v278 = vadd.f32 %v193, %v277
    %v279 = vpop.f32.mrf.mxu0
    %v280 = vpop.f32.mrf.mxu0
    %v281 = vadd.f32 %v193, %v280
    %v282 = vpop.f32.mrf.mxu0
    %283 = vdwg.mxu0
    %284 = vst [vmem:[%s5] sm:$0xff] %v278
    %285 = vst [vmem:[%s5 + $0x8] sm:$0xff] %v281
    // Predicated region
    $region30: #{_lambda_.1} parent=1 // pred_check
      _
    $region31: #{_lambda_.1} parent=1 // pred_check_branch
      %287 = sbr.rel (0) target = $region33
    $region32: #{_lambda_.1} parent=1 // pred_region
      _
    $region33: #{_lambda_.1} parent=1 // pred_fallthru
      _
    // Predicated region
    $region34: #{_lambda_.1} parent=1 // pred_check
      _
    $region35: #{_lambda_.1} parent=1 // pred_check_branch
      %289 = sbr.rel (0) target = $region37
    $region36: #{_lambda_.1} parent=1 // pred_region
      _
    $region37: #{_lambda_.1} parent=1 // pred_fallthru
      _
    %290 = vsyncpa [#allocation3], 1
    %291 = vsyncpa [#allocation5], 1

</llo_original>
